<compile_context>
chip_gen: v6e
topology: v6e:2x2x1
jax: 0.10.0
libtpu: 0.0.40
codegen_flags: <defaults>
</compile_context>

<pallas_src>
import functools

import jax
import jax.numpy as jnp
from jax.experimental import pallas as pl
from jax.experimental.pallas import tpu as pltpu


def residual_block_kernel(x_ref, id_ref, w_ref, wid_ref, bid_ref,
                          gamma_ref, beta_ref, out_ref, *, eps, negative_slope):
    # x_ref:     [B, I]   f32   main-branch input (whole batch, whole I)
    # id_ref:    [B, I]   f32   identity-branch input
    # w_ref:     [I, To]  bf16  main linear weight tile (pre-transposed, no bias)
    # wid_ref:   [I, To]  bf16  identity_transform weight tile (pre-transposed)
    # bid_ref:   [1, To]  f32   identity_transform bias tile
    # gamma_ref: [1, To]  f32   BatchNorm weight tile
    # beta_ref:  [1, To]  f32   BatchNorm bias tile
    # out_ref:   [B, To]  f32   (last tile may be partially stored / masked)

    # --- main branch: Linear (no bias); in-kernel bf16 cast, f32 MXU accumulation ---
    x = x_ref[...].astype(jnp.bfloat16)
    out = jnp.dot(x, w_ref[...], preferred_element_type=jnp.float32)     # [B, To] f32

    # --- BatchNorm1d: one-pass batch statistics (biased variance), folded affine ---
    inv_b = 1.0 / out.shape[0]
    s1 = jnp.sum(out, axis=0, keepdims=True)                             # [1, To]
    s2 = jnp.sum(out * out, axis=0, keepdims=True)                       # [1, To]
    mean = s1 * inv_b
    var = jnp.maximum(s2 * inv_b - mean * mean, 0.0)                     # clamp >= 0
    scale = jax.lax.rsqrt(var + eps) * gamma_ref[...]
    shift = beta_ref[...] - mean * scale
    out = out * scale + shift

    # --- LeakyReLU (default negative_slope = 0.01) ---
    out = jnp.where(out >= 0, out, negative_slope * out)

    # --- Dropout: identity (see TODO at top) ---

    # --- identity branch: Linear with bias, then residual add ---
    idt = jnp.dot(id_ref[...].astype(jnp.bfloat16), wid_ref[...],
                  preferred_element_type=jnp.float32) + bid_ref[...]     # [B, To]
    out_ref[...] = (out + idt).astype(out_ref.dtype)


def choose_tile_o(out_features):
    # 256 fills the 2x256 MXU on v6e/v7x when the output is wide enough to still
    # leave >= 2 tiles (so v7x's second TensorCore has work); otherwise 128,
    # which is native on v5e and right for narrow / single-tile outputs.
    return 256 if out_features >= 512 else 128


def prepare_params(w, w_id, b_id, gamma, beta, *, tile_o=None):
    """One-time parameter prep (off the hot path).

    Torch layout in: w, w_id are [O, I]; b_id/gamma/beta are [O].
    Returns weights transposed to [I, O_pad] (bf16) and vectors lifted to
    [1, O_pad] (f32), with O zero-padded to a multiple of `tile_o` (lane-dense).
    """
    O, I = w.shape
    if tile_o is None:
        tile_o = choose_tile_o(O)
    o_pad = pl.cdiv(O, tile_o) * tile_o

    def prep_weight(m):                                  # [O, I] -> [I, O_pad] bf16
        mt = jnp.asarray(m, jnp.float32).T
        mt = jnp.pad(mt, ((0, 0), (0, o_pad - O)))
        return mt.astype(jnp.bfloat16)

    def prep_vec(v):                                     # [O] -> [1, O_pad] f32
        v = jnp.pad(jnp.asarray(v, jnp.float32), (0, o_pad - O))
        return v.reshape(1, o_pad)

    params = {
        "w_t": prep_weight(w), "wid_t": prep_weight(w_id),
        "b_id": prep_vec(b_id), "gamma": prep_vec(gamma), "beta": prep_vec(beta),
        "out_features": O, "o_pad": o_pad, "tile_o": tile_o,
    }
    # Padded columns of the per-feature vectors must stay zero (defensive: they
    # are never stored now that out_shape is unpadded, but keep the invariant).
    if o_pad > O:
        assert bool(jnp.all(params["gamma"][:, O:] == 0))
        assert bool(jnp.all(params["beta"][:, O:] == 0))
        assert bool(jnp.all(params["b_id"][:, O:] == 0))
    return params


def residual_block(x, identity, params, *, eps=1e-5, negative_slope=0.01):
    """x, identity: [B, I] f32; returns [B, out_features] f32."""
    B, I = x.shape
    O = params["out_features"]
    o_pad = params["o_pad"]
    tile_o = params["tile_o"]
    n_tiles = o_pad // tile_o

    # Hot path has zero glue ops: no casts, no pads, no post-call slice.
    x = jnp.asarray(x, jnp.float32)
    identity = jnp.asarray(identity, jnp.float32)

    # VMEM budget per grid step (double-buffered blocks) + headroom, clamped so
    # it stays inside v7x's 64 MiB per-TensorCore VMEM.
    blk_bytes = (2 * B * I * 4            # x + identity f32 blocks
                 + 2 * I * tile_o * 2     # two bf16 weight tiles
                 + 3 * tile_o * 4         # b_id / gamma / beta rows
                 + B * tile_o * 4)        # output tile
    vmem_limit = min(max(2 * blk_bytes + (4 << 20), 32 << 20), 64 << 20)

    cost = pl.CostEstimate(
        flops=2 * 2 * B * I * o_pad,                       # two matmuls
        transcendentals=o_pad,                             # rsqrt per feature
        bytes_accessed=(2 * B * I * 4                      # x + identity (f32)
                        + 2 * I * o_pad * 2                # two bf16 weights
                        + 3 * o_pad * 4                    # b_id / gamma / beta
                        + B * O * 4))                      # output

    kernel = functools.partial(residual_block_kernel,
                               eps=eps, negative_slope=negative_slope)

    return pl.pallas_call(
        kernel,
        out_shape=jax.ShapeDtypeStruct((B, O), jnp.float32),   # unpadded: last
        grid=(n_tiles,),                                       # tile store masked
        in_specs=[
            pl.BlockSpec((B, I), lambda j: (0, 0)),        # x (same for every O tile)
            pl.BlockSpec((B, I), lambda j: (0, 0)),        # identity
            pl.BlockSpec((I, tile_o), lambda j: (0, j)),   # W^T tile
            pl.BlockSpec((I, tile_o), lambda j: (0, j)),   # W_id^T tile
            pl.BlockSpec((1, tile_o), lambda j: (0, j)),   # b_id tile
            pl.BlockSpec((1, tile_o), lambda j: (0, j)),   # gamma tile
            pl.BlockSpec((1, tile_o), lambda j: (0, j)),   # beta tile
        ],
        out_specs=pl.BlockSpec((B, tile_o), lambda j: (0, j)),
        compiler_params=pltpu.CompilerParams(
            dimension_semantics=("parallel",),             # O tiles are independent
            vmem_limit_bytes=vmem_limit),
        cost_estimate=cost,
    )(x, identity, params["w_t"], params["wid_t"],
      params["b_id"], params["gamma"], params["beta"])


def residual_block_ref(x, identity, w, w_id, b_id, gamma, beta,
                       *, eps=1e-5, negative_slope=0.01):
    # Mirrors the kernel numerics: bf16-rounded matmul operands, f32 accumulation.
    bf = lambda a: jnp.asarray(a, jnp.bfloat16).astype(jnp.float32)
    out = bf(x) @ bf(w).T
    mean = out.mean(axis=0, keepdims=True)
    var = ((out - mean) ** 2).mean(axis=0, keepdims=True)  # biased, as BN uses
    out = (out - mean) / jnp.sqrt(var + eps) * gamma + beta
    out = jnp.where(out >= 0, out, negative_slope * out)
    idt = bf(identity) @ bf(w_id).T + b_id
    return out + idt


if __name__ == "__main__":
    B, input_size, output_size = 8, 32, 64   # input_size != output_size -> identity_transform
    dropout_rate = 0.1                       # unused (identity at inference)

    key = jax.random.PRNGKey(0)
    kx, kid, kw, kwi, kbi, kg, kb = jax.random.split(key, 7)

    x = jax.random.normal(kx, (B, input_size), jnp.float32)
    identity = jax.random.normal(kid, (B, input_size), jnp.float32)

    # Deterministic parameter init (torch layout: Linear.weight is [out, in]).
    w = jax.random.normal(kw, (output_size, input_size), jnp.float32) * 0.1
    w_id = jax.random.normal(kwi, (output_size, input_size), jnp.float32) * 0.1
    b_id = jax.random.normal(kbi, (output_size,), jnp.float32) * 0.1
    gamma = 1.0 + 0.05 * jax.random.normal(kg, (output_size,), jnp.float32)
    beta = 0.05 * jax.random.normal(kb, (output_size,), jnp.float32)

    params = prepare_params(w, w_id, b_id, gamma, beta)    # one-time, off the hot path
    out = residual_block(x, identity, params)
    out = jax.block_until_ready(out)

    ref = residual_block_ref(x, identity, w, w_id, b_id, gamma, beta)
    assert out.shape == (B, output_size)
    assert jnp.allclose(out, ref, atol=2e-3, rtol=2e-3), "mismatch vs JAX reference"

    print("KERNEL_OK")
</pallas_src>

<mosaic_0001>
module attributes {stable_mosaic.version = 11 : i64} {
  func.func @residual_block_kernel(%arg0: i32, %arg1: memref<8x32xf32, #tpu.memory_space<vmem>>, %arg2: memref<8x32xf32, #tpu.memory_space<vmem>>, %arg3: memref<32x128xbf16, #tpu.memory_space<vmem>>, %arg4: memref<32x128xbf16, #tpu.memory_space<vmem>>, %arg5: memref<1x128xf32, #tpu.memory_space<vmem>>, %arg6: memref<1x128xf32, #tpu.memory_space<vmem>>, %arg7: memref<1x128xf32, #tpu.memory_space<vmem>>, %arg8: memref<8x128xf32, #tpu.memory_space<vmem>>) attributes {dimension_semantics = [#tpu.dimension_semantics<parallel>], iteration_bounds = array<i64: 1>, scalar_prefetch = 0 : i64, scratch_operands = 0 : i64, tpu.core_type = #tpu.core_type<tc>, window_params = [{pipeline_mode = #tpu.pipeline_mode<synchronous>, transform_indices = @transform_0, window_bounds = array<i64: 8, 32>}, {pipeline_mode = #tpu.pipeline_mode<synchronous>, transform_indices = @transform_1, window_bounds = array<i64: 8, 32>}, {transform_indices = @transform_2, window_bounds = array<i64: 32, 128>}, {transform_indices = @transform_3, window_bounds = array<i64: 32, 128>}, {transform_indices = @transform_4, window_bounds = array<i64: 1, 128>}, {transform_indices = @transform_5, window_bounds = array<i64: 1, 128>}, {transform_indices = @transform_6, window_bounds = array<i64: 1, 128>}, {transform_indices = @transform_7, window_bounds = array<i64: 8, 128>}]} {
    %c0 = arith.constant 0 : index
    %c0_0 = arith.constant 0 : index
    %0 = vector.load %arg1[%c0, %c0_0] : memref<8x32xf32, #tpu.memory_space<vmem>>, vector<8x32xf32>
    %1 = arith.truncf %0 : vector<8x32xf32> to vector<8x32xbf16>
    %c0_1 = arith.constant 0 : index
    %c0_2 = arith.constant 0 : index
    %2 = vector.load %arg3[%c0_1, %c0_2] : memref<32x128xbf16, #tpu.memory_space<vmem>>, vector<32x128xbf16>
    %cst = arith.constant dense<0.000000e+00> : vector<8x128xf32>
    %3 = tpu.matmul %1, %2, %cst {dimension_numbers = #tpu.dot_dimension_numbers<[1], [0], [0], [1], [0, 0, 1, 1], [], []>} : vector<8x32xbf16>, vector<32x128xbf16>, vector<8x128xf32> -> vector<8x128xf32>
    %cst_3 = arith.constant dense<0.000000e+00> : vector<128xf32>
    %4 = vector.multi_reduction <add>, %3, %cst_3 [0] : vector<8x128xf32> to vector<128xf32>
    %5 = vector.shape_cast %4 : vector<128xf32> to vector<1x128xf32>
    %6 = arith.mulf %3, %3 : vector<8x128xf32>
    %cst_4 = arith.constant dense<0.000000e+00> : vector<128xf32>
    %7 = vector.multi_reduction <add>, %6, %cst_4 [0] : vector<8x128xf32> to vector<128xf32>
    %8 = vector.shape_cast %7 : vector<128xf32> to vector<1x128xf32>
    %cst_5 = arith.constant 1.250000e-01 : f32
    %9 = vector.broadcast %cst_5 : f32 to vector<1x128xf32>
    %10 = arith.mulf %5, %9 : vector<1x128xf32>
    %cst_6 = arith.constant 1.250000e-01 : f32
    %11 = vector.broadcast %cst_6 : f32 to vector<1x128xf32>
    %12 = arith.mulf %8, %11 : vector<1x128xf32>
    %13 = arith.mulf %10, %10 : vector<1x128xf32>
    %14 = arith.subf %12, %13 : vector<1x128xf32>
    %cst_7 = arith.constant 0.000000e+00 : f32
    %15 = vector.broadcast %cst_7 : f32 to vector<1x128xf32>
    %16 = arith.maximumf %14, %15 : vector<1x128xf32>
    %cst_8 = arith.constant 9.99999974E-6 : f32
    %17 = vector.broadcast %cst_8 : f32 to vector<1x128xf32>
    %18 = arith.addf %16, %17 : vector<1x128xf32>
    %19 = math.rsqrt %18 : vector<1x128xf32>
    %c0_9 = arith.constant 0 : index
    %c0_10 = arith.constant 0 : index
    %20 = vector.load %arg6[%c0_9, %c0_10] : memref<1x128xf32, #tpu.memory_space<vmem>>, vector<1x128xf32>
    %21 = arith.mulf %19, %20 : vector<1x128xf32>
    %c0_11 = arith.constant 0 : index
    %c0_12 = arith.constant 0 : index
    %22 = vector.load %arg7[%c0_11, %c0_12] : memref<1x128xf32, #tpu.memory_space<vmem>>, vector<1x128xf32>
    %23 = arith.mulf %10, %21 : vector<1x128xf32>
    %24 = arith.subf %22, %23 : vector<1x128xf32>
    %25 = vector.broadcast %21 : vector<1x128xf32> to vector<8x128xf32>
    %26 = arith.mulf %3, %25 : vector<8x128xf32>
    %27 = vector.broadcast %24 : vector<1x128xf32> to vector<8x128xf32>
    %28 = arith.addf %26, %27 : vector<8x128xf32>
    %cst_13 = arith.constant 0.000000e+00 : f32
    %29 = vector.broadcast %cst_13 : f32 to vector<8x128xf32>
    %30 = arith.cmpf oge, %28, %29 : vector<8x128xf32>
    %cst_14 = arith.constant 0.00999999977 : f32
    %31 = vector.broadcast %cst_14 : f32 to vector<8x128xf32>
    %32 = arith.mulf %31, %28 : vector<8x128xf32>
    %33 = arith.select %30, %28, %32 : vector<8x128xi1>, vector<8x128xf32>
    %c0_15 = arith.constant 0 : index
    %c0_16 = arith.constant 0 : index
    %34 = vector.load %arg2[%c0_15, %c0_16] : memref<8x32xf32, #tpu.memory_space<vmem>>, vector<8x32xf32>
    %35 = arith.truncf %34 : vector<8x32xf32> to vector<8x32xbf16>
    %c0_17 = arith.constant 0 : index
    %c0_18 = arith.constant 0 : index
    %36 = vector.load %arg4[%c0_17, %c0_18] : memref<32x128xbf16, #tpu.memory_space<vmem>>, vector<32x128xbf16>
    %cst_19 = arith.constant dense<0.000000e+00> : vector<8x128xf32>
    %37 = tpu.matmul %35, %36, %cst_19 {dimension_numbers = #tpu.dot_dimension_numbers<[1], [0], [0], [1], [0, 0, 1, 1], [], []>} : vector<8x32xbf16>, vector<32x128xbf16>, vector<8x128xf32> -> vector<8x128xf32>
    %c0_20 = arith.constant 0 : index
    %c0_21 = arith.constant 0 : index
    %38 = vector.load %arg5[%c0_20, %c0_21] : memref<1x128xf32, #tpu.memory_space<vmem>>, vector<1x128xf32>
    %39 = vector.broadcast %38 : vector<1x128xf32> to vector<8x128xf32>
    %40 = arith.addf %37, %39 : vector<8x128xf32>
    %41 = arith.addf %33, %40 : vector<8x128xf32>
    %c0_22 = arith.constant 0 : index
    %c0_23 = arith.constant 0 : index
    %42 = vector.load %arg8[%c0_22, %c0_23] : memref<8x128xf32, #tpu.memory_space<vmem>>, vector<8x128xf32>
    tpu.vector_store %arg8[%c0_22, %c0_23], %41 {strides = array<i32>} : memref<8x128xf32, #tpu.memory_space<vmem>>, vector<8x128xf32>,
    return
  }
  func.func @transform_0(%arg0: i32) -> (i32, i32) {
    %c0_i32 = arith.constant 0 : i32
    %c0_i32_0 = arith.constant 0 : i32
    %c0_i32_1 = arith.constant 0 : i32
    return %c0_i32, %c0_i32_0 : i32, i32
  }
  func.func @transform_1(%arg0: i32) -> (i32, i32) {
    %c0_i32 = arith.constant 0 : i32
    %c0_i32_0 = arith.constant 0 : i32
    %c0_i32_1 = arith.constant 0 : i32
    return %c0_i32, %c0_i32_0 : i32, i32
  }
  func.func @transform_2(%arg0: i32) -> (i32, i32) {
    %c0_i32 = arith.constant 0 : i32
    %c0_i32_0 = arith.constant 0 : i32
    return %c0_i32, %arg0 : i32, i32
  }
  func.func @transform_3(%arg0: i32) -> (i32, i32) {
    %c0_i32 = arith.constant 0 : i32
    %c0_i32_0 = arith.constant 0 : i32
    return %c0_i32, %arg0 : i32, i32
  }
  func.func @transform_4(%arg0: i32) -> (i32, i32) {
    %c0_i32 = arith.constant 0 : i32
    %c0_i32_0 = arith.constant 0 : i32
    return %c0_i32, %arg0 : i32, i32
  }
  func.func @transform_5(%arg0: i32) -> (i32, i32) {
    %c0_i32 = arith.constant 0 : i32
    %c0_i32_0 = arith.constant 0 : i32
    return %c0_i32, %arg0 : i32, i32
  }
  func.func @transform_6(%arg0: i32) -> (i32, i32) {
    %c0_i32 = arith.constant 0 : i32
    %c0_i32_0 = arith.constant 0 : i32
    return %c0_i32, %arg0 : i32, i32
  }
  func.func @transform_7(%arg0: i32) -> (i32, i32) {
    %c0_i32 = arith.constant 0 : i32
    %c0_i32_0 = arith.constant 0 : i32
    return %c0_i32, %arg0 : i32, i32
  }
}

</mosaic_0001>

<llo_original>
// kernel: tpu_custom_call.1
$region0: #{tpu_custom_call.1}
  #allocation0 [shape = 'u32[]', space=smem, size = 0x4, offset = 0x4, fixed_abs, tag = 'smem constant byte address 0x4 - core index']
  #allocation1 [shape = 'u32[144,128]{1,0:T(1,128)}', space=vmem, size = 0x12000, scoped, tag = 'internal scratch']
  %s0 = inlined_call_operand.hbm [shape: f32[8,32], index: 0, kind: input, shape index: {}]
  %s1 = inlined_call_operand.hbm [shape: f32[8,32], index: 1, kind: input, shape index: {}]
  %s2 = inlined_call_operand.hbm [shape: bf16[32,128], index: 2, kind: input, shape index: {}]
  %s3 = inlined_call_operand.hbm [shape: bf16[32,128], index: 3, kind: input, shape index: {}]
  %s4 = inlined_call_operand.vmem [shape: f32[1,128], index: 4, kind: input, shape index: {}]
  %s5 = inlined_call_operand.vmem [shape: f32[1,128], index: 5, kind: input, shape index: {}]
  %s6 = inlined_call_operand.vmem [shape: f32[1,128], index: 6, kind: input, shape index: {}]
  %s7 = inlined_call_operand.hbm [shape: f32[8,64], index: 7, kind: output, shape index: {}]
  %s8 = sld [smem:[#allocation0]]
  $region54: #{tpu_custom_call.1} parent=0
    _
  %s10 = ssub.s32 1, %s8
  %s11 = scalar_select 0, %s10, %s8
  $region1: #{tpu_custom_call.1} parent=0
    #allocation2 [shape = 'u8[4096]{0}', space=vmem, size = 0x1000, scoped, tag = 'input window, operand 0, single buffered']
    #allocation3 [shape = 's32[1]{0}', space=sflag, size = 0x4, scoped, tag = 'scoped memory for tpu_custom_call.1']
    #allocation4 [shape = 's32[1]{0}', space=sflag, size = 0x4, scoped, tag = 'scoped memory for tpu_custom_call.1']
    #allocation5 [shape = 'u8[4096]{0}', space=vmem, size = 0x1000, scoped, tag = 'input window, operand 1, single buffered']
    #allocation6 [shape = 's32[1]{0}', space=sflag, size = 0x4, scoped, tag = 'scoped memory for tpu_custom_call.1']
    #allocation7 [shape = 'u8[8192]{0}', space=vmem, size = 0x2000, scoped, tag = 'input window, operand 2, single buffered']
    #allocation8 [shape = 'u8[8192]{0}', space=vmem, size = 0x2000, scoped, tag = 'input window, operand 3, single buffered']
    #allocation9 [shape = 's32[1]{0}', space=sflag, size = 0x4, scoped, tag = 'scoped memory for tpu_custom_call.1']
    #allocation10 [shape = 'u8[4096]{0}', space=vmem, size = 0x1000, scoped, tag = 'output window, operand 0, single buffered']
    %12 = vsyncpa [#allocation3], 0
    %13 = vsyncpa [#allocation6], 0
    %14 = vsyncpa [#allocation9], 0
    %15 = vsyncpa [#allocation4], 0
    // Predicated region
    $region2: #{tpu_custom_call.1} parent=1 // pred_check
      _
    $region3: #{tpu_custom_call.1} parent=1 // pred_check_branch
      %17 = sbr.rel (0) target = $region5
    $region4: #{tpu_custom_call.1} parent=1 // pred_region
      %s19 = ssub.s32 128, 128
      %20 = vsyncadd [#allocation3], %s19
      %s22 = sshll.u32 [#allocation2], 4
      %s23 = int_to_ptr.vmem [resolvable:$true] %s22
      %25 = dma.hbm_to_vmem [thread:$0]  %s0, 128, %s23, [#allocation3]
    $region5: #{tpu_custom_call.1} parent=1 // pred_fallthru
      _
    // Predicated region
    $region6: #{tpu_custom_call.1} parent=1 // pred_check
      _
    $region7: #{tpu_custom_call.1} parent=1 // pred_check_branch
      %27 = sbr.rel (0) target = $region9
    $region8: #{tpu_custom_call.1} parent=1 // pred_region
      %s29 = ssub.s32 128, 128
      %30 = vsyncadd [#allocation6], %s29
      %s32 = sshll.u32 [#allocation5], 4
      %s33 = int_to_ptr.vmem [resolvable:$true] %s32
      %35 = dma.hbm_to_vmem [thread:$0]  %s1, 128, %s33, [#allocation6]
    $region9: #{tpu_custom_call.1} parent=1 // pred_fallthru
      _
    // Predicated region
    $region10: #{tpu_custom_call.1} parent=1 // pred_check
      _
    $region11: #{tpu_custom_call.1} parent=1 // pred_check_branch
      %37 = sbr.rel (0) target = $region13
    $region12: #{tpu_custom_call.1} parent=1 // pred_region
      %s39 = ssub.s32 256, 256
      %40 = vsyncadd [#allocation6], %s39
      %s41 = sshll.u32 [#allocation7], 4
      %s42 = int_to_ptr.vmem [resolvable:$true] %s41
      %47 = dma.hbm_to_vmem [thread:$0]  %s2, 256, %s42, [#allocation6], 64, 64, 4
    $region13: #{tpu_custom_call.1} parent=1 // pred_fallthru
      _
    // Predicated region
    $region14: #{tpu_custom_call.1} parent=1 // pred_check
      _
    $region15: #{tpu_custom_call.1} parent=1 // pred_check_branch
      %49 = sbr.rel (0) target = $region17
    $region16: #{tpu_custom_call.1} parent=1 // pred_region
      %s51 = ssub.s32 256, 256
      %52 = vsyncadd [#allocation9], %s51
      %s53 = sshll.u32 [#allocation8], 4
      %s54 = int_to_ptr.vmem [resolvable:$true] %s53
      %59 = dma.hbm_to_vmem [thread:$0]  %s3, 256, %s54, [#allocation9], 64, 64, 4
    $region17: #{tpu_custom_call.1} parent=1 // pred_fallthru
      _
    // Predicated region
    $region18: #{tpu_custom_call.1} parent=1 // pred_check
      _
    $region19: #{tpu_custom_call.1} parent=1 // pred_check_branch
      %61 = sbr.rel (0) target = $region21
    $region20: #{tpu_custom_call.1} parent=1 // pred_region
      _
    $region21: #{tpu_custom_call.1} parent=1 // pred_fallthru
      _
    // Predicated region
    $region22: #{tpu_custom_call.1} parent=1 // pred_check
      _
    $region23: #{tpu_custom_call.1} parent=1 // pred_check_branch
      %63 = sbr.rel (0) target = $region25
    $region24: #{tpu_custom_call.1} parent=1 // pred_region
      _
    $region25: #{tpu_custom_call.1} parent=1 // pred_fallthru
      _
    // Predicated region
    $region26: #{tpu_custom_call.1} parent=1 // pred_check
      _
    $region27: #{tpu_custom_call.1} parent=1 // pred_check_branch
      %65 = sbr.rel (0) target = $region29
    $region28: #{tpu_custom_call.1} parent=1 // pred_region
      _
    $region29: #{tpu_custom_call.1} parent=1 // pred_fallthru
      _
    // Predicated region
    $region30: #{tpu_custom_call.1} parent=1 // pred_check
      _
    $region31: #{tpu_custom_call.1} parent=1 // pred_check_branch
      %67 = sbr.rel (0) target = $region33
    $region32: #{tpu_custom_call.1} parent=1 // pred_region
      %68 = dma.done [#allocation3], 128
    $region33: #{tpu_custom_call.1} parent=1 // pred_fallthru
      _
    // Predicated region
    $region34: #{tpu_custom_call.1} parent=1 // pred_check
      _
    $region35: #{tpu_custom_call.1} parent=1 // pred_check_branch
      %70 = sbr.rel (0) target = $region37
    $region36: #{tpu_custom_call.1} parent=1 // pred_region
      %71 = dma.done [#allocation6], 128
    $region37: #{tpu_custom_call.1} parent=1 // pred_fallthru
      _
    // Predicated region
    $region38: #{tpu_custom_call.1} parent=1 // pred_check
      _
    $region39: #{tpu_custom_call.1} parent=1 // pred_check_branch
      %73 = sbr.rel (0) target = $region41
    $region40: #{tpu_custom_call.1} parent=1 // pred_region
      %74 = dma.done [#allocation6], 256
    $region41: #{tpu_custom_call.1} parent=1 // pred_fallthru
      _
    // Predicated region
    $region42: #{tpu_custom_call.1} parent=1 // pred_check
      _
    $region43: #{tpu_custom_call.1} parent=1 // pred_check_branch
      %76 = sbr.rel (0) target = $region45
    $region44: #{tpu_custom_call.1} parent=1 // pred_region
      %77 = dma.done [#allocation9], 256
    $region45: #{tpu_custom_call.1} parent=1 // pred_fallthru
      _
    %v79 = vld [vmem:[#allocation2] sm:$0xff]
    %v80 = vpack.c.bf16 %v79, %v79
    %v81 = vld [vmem:[#allocation7] sm:$0xf]
    %v82 = vld [vmem:[#allocation7 + $0x4] sm:$0xf]
    %v83 = vld [vmem:[#allocation7 + $0x8] sm:$0xf]
    %v84 = vld [vmem:[#allocation7 + $0xc] sm:$0xf]
    %v89 = vunpack.c.l.b16 %v81
    %v90 = vunpack.c.l.b16 %v82
    %v91 = vunpack.c.l.b16 %v83
    %v92 = vunpack.c.l.b16 %v84
    %v93 = vpack.c.b16 %v90, %v89
    %v94 = vpack.c.b16 %v92, %v91
    %vm97 = vcmask 261120
    %v99 = vsel %vm97, %v80, 0
    %101 = vmatprep.subr.bf16.mxu0 0
    %102 = vmatpush1.bf16.msra.mxu0 0
    %103 = vmatprep.subr.bf16.mxu0 0
    %104 = vmatpush1.bf16.msra.mxu0 0
    %105 = vmatprep.subr.bf16.mxu0 0
    %106 = vmatpush1.bf16.msra.mxu0 0
    %107 = vmatprep.subr.bf16.mxu0 0
    %108 = vmatpush1.bf16.msra.mxu0 0
    %109 = vmatprep.subr.bf16.mxu0 0
    %110 = vmatpush1.bf16.msra.mxu0 0
    %111 = vmatprep.subr.bf16.mxu0 0
    %112 = vmatpush1.bf16.msra.mxu0 0
    %113 = vmatprep.subr.bf16.mxu0 0
    %114 = vmatpush1.bf16.msra.mxu0 %v94
    %115 = vmatprep.subr.bf16.mxu0 0
    %116 = vmatpush1.bf16.msra.mxu0 %v93
    %117 = vmatprep.subr.bf16.mxu0 0
    %118 = vmatpush2.bf16.msra.mxu0 0
    %119 = vmatprep.subr.bf16.mxu0 0
    %120 = vmatpush2.bf16.msra.mxu0 0
    %121 = vmatprep.subr.bf16.mxu0 0
    %122 = vmatpush2.bf16.msra.mxu0 0
    %123 = vmatprep.subr.bf16.mxu0 0
    %124 = vmatpush2.bf16.msra.mxu0 0
    %125 = vmatprep.subr.bf16.mxu0 0
    %126 = vmatpush2.bf16.msra.mxu0 0
    %127 = vmatprep.subr.bf16.mxu0 0
    %128 = vmatpush2.bf16.msra.mxu0 0
    %129 = vmatprep.subr.bf16.mxu0 0
    %130 = vmatpush2.bf16.msra.mxu0 0
    %131 = vmatprep.subr.bf16.mxu0 0
    %132 = vmatpush2.bf16.msra.mxu0 0
    %133 = vmatprep.mubr.bf16.mxu0 0
    %134 = vmatmul.mubr.bf16.gmra.mxu0 %v99
    %v135 = vpop.f32.mrf.mxu0
    %v136 = vadd.f32 0.0, %v135
    %v137 = vpop.f32.mrf.mxu0
    %v138 = vpop.f32.mrf.mxu0
    %v139 = vpop.f32.mrf.mxu0
    %140 = vdwg.mxu0
    %v141 = vrot.slane %v136, 4
    %v142 = vadd.f32 %v136, %v141
    %v143 = vrot.slane %v142, 2
    %v144 = vadd.f32 %v142, %v143
    %v145 = vrot.slane %v144, 1
    %v146 = vadd.f32 %v144, %v145
    %v147 = vmul.f32 %v136, %v136
    %v148 = vrot.slane %v147, 4
    %v149 = vadd.f32 %v147, %v148
    %v150 = vrot.slane %v149, 2
    %v151 = vadd.f32 %v149, %v150
    %v152 = vrot.slane %v151, 1
    %v153 = vadd.f32 %v151, %v152
    %v154 = vmul.f32 %v146, 0.125
    %v155 = vmul.f32 %v153, 0.125
    %v156 = vmul.f32 %v154, %v154
    %v157 = vsub.f32 %v155, %v156
    %v158 = vmax.f32 %v157, 0.0
    %v159 = vadd.f32 %v158, 1e-05
    %v160 = vrsqrt.pop %v159
    %v161 = vld [vmem:[%s5] sm:$0x1]
    %v162 = vmul.f32 %v160, %v161
    %v163 = vld [vmem:[%s6] sm:$0x1]
    %v164 = vmul.f32 %v154, %v162
    %v165 = vsub.f32 %v163, %v164
    %v166 = vlaneseq
    %v167 = vshrl.u32 %v166, 7
    %v168 = vsub.s32 0, %v167
    %v169 = vrot.slane %v162, %v168
    %v170 = vmul.f32 %v136, %v169
    %v172 = vlaneseq
    %v173 = vshrl.u32 %v172, 7
    %v174 = vsub.s32 0, %v173
    %v175 = vrot.slane %v165, %v174
    %v177 = vadd.f32 %v170, %v175
    %vm178 = vcmp.ge.f32.partialorder %v177, 0.0
    %v179 = vmul.f32 %v177, 0.01
    %v180 = vsel %vm178, %v177, %v179
    %v181 = vld [vmem:[#allocation5] sm:$0xff]
    %v182 = vpack.c.bf16 %v181, %v181
    %v183 = vld [vmem:[#allocation8] sm:$0xf]
    %v184 = vld [vmem:[#allocation8 + $0x4] sm:$0xf]
    %v185 = vld [vmem:[#allocation8 + $0x8] sm:$0xf]
    %v186 = vld [vmem:[#allocation8 + $0xc] sm:$0xf]
    %v187 = vld [vmem:[%s4] sm:$0x1]
    %v189 = vlaneseq
    %v190 = vshrl.u32 %v189, 7
    %v191 = vsub.s32 0, %v190
    %v192 = vrot.slane %v187, %v191
    %v198 = vunpack.c.l.b16 %v183
    %v199 = vunpack.c.l.b16 %v184
    %v200 = vunpack.c.l.b16 %v185
    %v201 = vunpack.c.l.b16 %v186
    %v202 = vpack.c.b16 %v199, %v198
    %v203 = vpack.c.b16 %v201, %v200
    %v207 = vsel %vm97, %v182, 0
    %209 = vmatprep.subr.bf16.mxu0 0
    %210 = vmatpush1.bf16.msra.mxu0 0
    %211 = vmatprep.subr.bf16.mxu0 0
    %212 = vmatpush1.bf16.msra.mxu0 0
    %213 = vmatprep.subr.bf16.mxu0 0
    %214 = vmatpush1.bf16.msra.mxu0 0
    %215 = vmatprep.subr.bf16.mxu0 0
    %216 = vmatpush1.bf16.msra.mxu0 0
    %217 = vmatprep.subr.bf16.mxu0 0
    %218 = vmatpush1.bf16.msra.mxu0 0
    %219 = vmatprep.subr.bf16.mxu0 0
    %220 = vmatpush1.bf16.msra.mxu0 0
    %221 = vmatprep.subr.bf16.mxu0 0
    %222 = vmatpush1.bf16.msra.mxu0 %v203
    %223 = vmatprep.subr.bf16.mxu0 0
    %224 = vmatpush1.bf16.msra.mxu0 %v202
    %225 = vmatprep.subr.bf16.mxu0 0
    %226 = vmatpush2.bf16.msra.mxu0 0
    %227 = vmatprep.subr.bf16.mxu0 0
    %228 = vmatpush2.bf16.msra.mxu0 0
    %229 = vmatprep.subr.bf16.mxu0 0
    %230 = vmatpush2.bf16.msra.mxu0 0
    %231 = vmatprep.subr.bf16.mxu0 0
    %232 = vmatpush2.bf16.msra.mxu0 0
    %233 = vmatprep.subr.bf16.mxu0 0
    %234 = vmatpush2.bf16.msra.mxu0 0
    %235 = vmatprep.subr.bf16.mxu0 0
    %236 = vmatpush2.bf16.msra.mxu0 0
    %237 = vmatprep.subr.bf16.mxu0 0
    %238 = vmatpush2.bf16.msra.mxu0 0
    %239 = vmatprep.subr.bf16.mxu0 0
    %240 = vmatpush2.bf16.msra.mxu0 0
    %241 = vmatprep.mubr.bf16.mxu0 0
    %242 = vmatmul.mubr.bf16.gmra.mxu0 %v207
    %v243 = vpop.f32.mrf.mxu0
    %v244 = vadd.f32 %v192, %v243
    %v245 = vpop.f32.mrf.mxu0
    %v246 = vpop.f32.mrf.mxu0
    %v247 = vpop.f32.mrf.mxu0
    %248 = vdwg.mxu0
    %v249 = vadd.f32 %v180, %v244
    %250 = vst [vmem:[#allocation10] sm:$0xff] %v249
    // Predicated region
    $region46: #{tpu_custom_call.1} parent=1 // pred_check
      _
    $region47: #{tpu_custom_call.1} parent=1 // pred_check_branch
      %252 = sbr.rel (0) target = $region49
    $region48: #{tpu_custom_call.1} parent=1 // pred_region
      %s254 = ssub.s32 128, 128
      %255 = vsyncadd [#allocation4], %s254
      %s257 = sshll.u32 [#allocation10], 4
      %s258 = int_to_ptr.vmem [resolvable:$true] %s257
      %260 = dma.vmem_to_hbm [thread:$0]  %s258, 128, %s7, [#allocation4]
    $region49: #{tpu_custom_call.1} parent=1 // pred_fallthru
      _
    // Predicated region
    $region50: #{tpu_custom_call.1} parent=1 // pred_check
      _
    $region51: #{tpu_custom_call.1} parent=1 // pred_check_branch
      %262 = sbr.rel (0) target = $region53
    $region52: #{tpu_custom_call.1} parent=1 // pred_region
      %263 = dma.done [#allocation4], 128
    $region53: #{tpu_custom_call.1} parent=1 // pred_fallthru
      _
    %264 = vsyncpa [#allocation3], 1
    %265 = vsyncpa [#allocation6], 1
    %266 = vsyncpa [#allocation9], 1
    %267 = vsyncpa [#allocation4], 1

</llo_original>
